<compile_context>
chip_gen: v6e
topology: v6e:2x2x1
jax: 0.10.0
libtpu: 0.0.40
codegen_flags: <defaults>
</compile_context>

<pallas_src>
import jax
import jax.numpy as jnp
from jax import lax
from jax.experimental import pallas as pl
from jax.experimental.pallas import tpu as pltpu


# ----------------------------------------------------------------------------
# Pallas kernel: fused gather+projection, unrolled RNN recurrence, classifier.
# ----------------------------------------------------------------------------
def rnn_classifier_kernel(ids_ref,    # (T*Bp, 1) int32 time-major token ids
                          lens_ref,   # (Bp, 1)   int32 sequence lengths
                          h0_ref,     # (Bp, H)   initial hidden state
                          embp_ref,   # (Vp, H)   pre-projected table: emb @ W_ih
                          whh_ref,    # (H, H)    hidden-to-hidden weights
                          b_ref,      # (1, H)    combined bias (b_ih + b_hh)
                          wc_ref,     # (H, Cp)   classifier weights (lane-padded)
                          bc_ref,     # (1, Cp)   classifier bias (lane-padded)
                          out_ref):   # (Bp, Cp)  logits (lane-padded)
    TB = ids_ref.shape[0]
    Bp, H = h0_ref.shape
    Vp = embp_ref.shape[0]
    T = TB // Bp

    # ---- fused embedding gather + input projection for ALL timesteps --------
    # One-hot selection (exact) against the pre-projected (Vp, H) table, i.e.
    # onehot @ (emb @ W_ih) == emb[ids] @ W_ih, done as ONE MXU matmul. Bias is
    # folded in once here instead of per step.
    ids = ids_ref[...]                                              # (TB, 1)
    onehot = (ids == lax.broadcasted_iota(jnp.int32, (TB, Vp), 1)
              ).astype(jnp.float32)                                 # (TB, Vp)
    xp = (jnp.dot(onehot, embp_ref[...], preferred_element_type=jnp.float32)
          + b_ref[...]).reshape(T, Bp, H)

    # ---- hoisted, loop-invariant loads / masks -------------------------------
    whh = whh_ref[...]                                              # (H, H)
    # pack_padded_sequence semantics: hidden stops updating once t >= seq_len[b].
    # Precompute all T freeze masks once (single compare + broadcast).
    masks = (lens_ref[...][None, :, :] >
             lax.broadcasted_iota(jnp.int32, (T, Bp, H), 0))        # (T, Bp, H)

    # ---- recurrence, fully unrolled (T is a static Python int) --------------
    # TODO(synk): switch the per-step jnp.dot(h, whh) to an explicit
    # push_rhs-once / acc_lhs-per-step MXU schedule once validated for H=32.
    h = h0_ref[...]
    for t in range(T):
        cand = jnp.tanh(xp[t] + jnp.dot(h, whh,
                                        preferred_element_type=jnp.float32))
        h = jnp.where(masks[t], cand, h)

    # ---- classifier: lane-dense (Bp, Cp) unmasked store ----------------------
    out_ref[...] = (jnp.dot(h, wc_ref[...], preferred_element_type=jnp.float32)
                    + bc_ref[...])


# ----------------------------------------------------------------------------
# One-time parameter preparation (padding + embedding pre-projection).
# ----------------------------------------------------------------------------
def prepare_params(params, batch_size):
    """Hoists all parameter-derived padding/reshaping out of the per-call path."""
    emb = params["embedding"]                    # (V, E)
    w_ih = params["w_ih"]                        # (E, H)
    V = emb.shape[0]
    H = params["w_hh"].shape[0]
    C = params["w_c"].shape[1]

    B_pad = ((batch_size + 7) // 8) * 8          # full f32 sublane tile
    C_pad = ((C + 127) // 128) * 128             # full lane tile (dense vst)
    V_pad = ((V + 7) // 8) * 8

    # Pre-projected embedding table: emb @ W_ih (exact under one-hot selection).
    emb_proj = jnp.zeros((V_pad, H), jnp.float32).at[:V].set(
        emb.astype(jnp.float32) @ w_ih)
    # NOTE: padded batch rows MUST stay zero here (together with lens == 0 they
    # keep h frozen at 0) -- they are sliced off after the kernel.
    h0 = jnp.zeros((B_pad, H), jnp.float32).at[:batch_size].set(params["h0"])
    wc = jnp.zeros((H, C_pad), jnp.float32).at[:, :C].set(params["w_c"])
    bc = jnp.zeros((1, C_pad), jnp.float32).at[:, :C].set(params["b_c"])

    return {
        "emb_proj": emb_proj, "h0": h0, "w_hh": params["w_hh"], "b": params["b"],
        "w_c": wc, "b_c": bc,
        "B_pad": B_pad, "C": C, "C_pad": C_pad,
    }


# ----------------------------------------------------------------------------
# Per-call wrapper: only data-dependent (cheap) prep + pallas_call.
# ----------------------------------------------------------------------------
def program_classifier_forward(program, program_len, prep):
    """program: (B, T) int32 token ids; program_len: (B,) int32 lengths."""
    B, T = program.shape
    B_pad, C, C_pad = prep["B_pad"], prep["C"], prep["C_pad"]

    # Time-major ids, batch-padded, flattened row order = t * B_pad + b.
    ids = jnp.pad(program.T.astype(jnp.int32), ((0, 0), (0, B_pad - B)))
    ids = ids.reshape(T * B_pad, 1)
    # lens == 0 for padded rows => those rows never update (see prepare_params).
    lens = jnp.pad(program_len.astype(jnp.int32), (0, B_pad - B)).reshape(B_pad, 1)

    vmem = pl.BlockSpec(memory_space=pltpu.MemorySpace.VMEM)
    out = pl.pallas_call(
        rnn_classifier_kernel,
        out_shape=jax.ShapeDtypeStruct((B_pad, C_pad), jnp.float32),
        in_specs=[vmem] * 8,
        out_specs=vmem,
    )(ids, lens, prep["h0"], prep["emb_proj"], prep["w_hh"], prep["b"],
      prep["w_c"], prep["b_c"])
    return out[:B, :C]


# ----------------------------------------------------------------------------
# Pure-JAX reference (mirrors PyTorch nn.RNN + pack_padded_sequence + Linear).
# ----------------------------------------------------------------------------
def reference_forward(program, program_len, params):
    x = params["embedding"][program].astype(jnp.float32)   # (B, T, E)
    B, T, _ = x.shape
    h = params["h0"]
    for t in range(T):
        cand = jnp.tanh(
            x[:, t, :] @ params["w_ih"] + h @ params["w_hh"] + params["b"]
        )
        valid = (t < program_len)[:, None]
        h = jnp.where(valid, cand, h)
    return h @ params["w_c"] + params["b_c"]


# ----------------------------------------------------------------------------
# Deterministic parameter initialization (synthetic; mimics PyTorch init laws).
# ----------------------------------------------------------------------------
def init_params(key, vocab_size, embedding_size, hidden_size, num_labels, batch_size):
    k = jax.random.split(key, 8)
    inv_sqrt_h = 1.0 / jnp.sqrt(hidden_size)
    # nn.Embedding: N(0, 1)
    embedding = jax.random.normal(k[0], (vocab_size, embedding_size), jnp.float32)
    # nn.RNN: U(-1/sqrt(H), 1/sqrt(H)); stored as (in, out) for h @ W in-kernel.
    w_ih = jax.random.uniform(k[1], (embedding_size, hidden_size), jnp.float32,
                              -inv_sqrt_h, inv_sqrt_h)
    w_hh = jax.random.uniform(k[2], (hidden_size, hidden_size), jnp.float32,
                              -inv_sqrt_h, inv_sqrt_h)
    b_ih = jax.random.uniform(k[3], (hidden_size,), jnp.float32, -inv_sqrt_h, inv_sqrt_h)
    b_hh = jax.random.uniform(k[4], (hidden_size,), jnp.float32, -inv_sqrt_h, inv_sqrt_h)
    # h0: xavier_normal_ over (num_layers=1, B, H) -> std = sqrt(2 / (B + H))
    h0_std = jnp.sqrt(2.0 / (batch_size + hidden_size))
    h0 = jax.random.normal(k[5], (batch_size, hidden_size), jnp.float32) * h0_std
    # nn.Linear(H, num_labels): U(-1/sqrt(H), 1/sqrt(H))
    w_c = jax.random.uniform(k[6], (hidden_size, num_labels), jnp.float32,
                             -inv_sqrt_h, inv_sqrt_h)
    b_c = jax.random.uniform(k[7], (num_labels,), jnp.float32, -inv_sqrt_h, inv_sqrt_h)
    return {
        "embedding": embedding,
        "w_ih": w_ih,
        "w_hh": w_hh,
        "b": (b_ih + b_hh).reshape(1, hidden_size),
        "h0": h0,
        "w_c": w_c,
        "b_c": b_c.reshape(1, num_labels),
    }


if __name__ == "__main__":
    # Small shapes consistent with the module's forward.
    VOCAB = 50
    B, T = 2, 8
    E, H = 32, 32          # embedding_size / hidden_size via kwargs
    NUM_LABELS = 8

    key = jax.random.PRNGKey(0)
    k_tok, k_param = jax.random.split(key)

    program = jax.random.randint(k_tok, (B, T), 0, VOCAB, dtype=jnp.int32)
    program_len = jnp.array([T, T - 3], dtype=jnp.int32)   # variable lengths

    params = init_params(k_param, VOCAB, E, H, NUM_LABELS, B)
    prep = prepare_params(params, B)        # one-time padding + pre-projection

    logits = program_classifier_forward(program, program_len, prep)
    logits = jax.block_until_ready(logits)

    ref = reference_forward(program, program_len, params)
    assert logits.shape == (B, NUM_LABELS)
    assert jnp.allclose(logits, ref, atol=1e-5, rtol=1e-5), "mismatch vs reference"

    print("KERNEL_OK")
</pallas_src>

<mosaic_0001>
module attributes {stable_mosaic.version = 11 : i64} {
  func.func @rnn_classifier_kernel(%arg0: memref<64x1xi32, #tpu.memory_space<vmem>>, %arg1: memref<8x1xi32, #tpu.memory_space<vmem>>, %arg2: memref<8x32xf32, #tpu.memory_space<vmem>>, %arg3: memref<56x32xf32, #tpu.memory_space<vmem>>, %arg4: memref<32x32xf32, #tpu.memory_space<vmem>>, %arg5: memref<1x32xf32, #tpu.memory_space<vmem>>, %arg6: memref<32x128xf32, #tpu.memory_space<vmem>>, %arg7: memref<1x128xf32, #tpu.memory_space<vmem>>, %arg8: memref<8x128xf32, #tpu.memory_space<vmem>>) attributes {dimension_semantics = [], scalar_prefetch = 0 : i64, scratch_operands = 0 : i64, tpu.core_type = #tpu.core_type<tc>} {
    %c0 = arith.constant 0 : index
    %c0_0 = arith.constant 0 : index
    %0 = vector.load %arg0[%c0, %c0_0] : memref<64x1xi32, #tpu.memory_space<vmem>>, vector<64x1xi32>
    %1 = tpu.iota {dimensions = array<i32: 1>} : vector<64x56xi32>
    %2 = vector.broadcast %0 : vector<64x1xi32> to vector<64x56xi32>
    %3 = arith.cmpi eq, %2, %1 : vector<64x56xi32>
    %4 = arith.extui %3 : vector<64x56xi1> to vector<64x56xi32>
    %5 = arith.sitofp %4 : vector<64x56xi32> to vector<64x56xf32>
    %c0_1 = arith.constant 0 : index
    %c0_2 = arith.constant 0 : index
    %6 = vector.load %arg3[%c0_1, %c0_2] : memref<56x32xf32, #tpu.memory_space<vmem>>, vector<56x32xf32>
    %cst = arith.constant dense<0.000000e+00> : vector<64x32xf32>
    %7 = tpu.matmul %5, %6, %cst {dimension_numbers = #tpu.dot_dimension_numbers<[1], [0], [0], [1], [0, 0, 1, 1], [], []>} : vector<64x56xf32>, vector<56x32xf32>, vector<64x32xf32> -> vector<64x32xf32>
    %c0_3 = arith.constant 0 : index
    %c0_4 = arith.constant 0 : index
    %8 = vector.load %arg5[%c0_3, %c0_4] : memref<1x32xf32, #tpu.memory_space<vmem>>, vector<1x32xf32>
    %9 = vector.broadcast %8 : vector<1x32xf32> to vector<64x32xf32>
    %10 = arith.addf %7, %9 : vector<64x32xf32>
    %11 = vector.shape_cast %10 : vector<64x32xf32> to vector<8x8x32xf32>
    %c0_5 = arith.constant 0 : index
    %c0_6 = arith.constant 0 : index
    %12 = vector.load %arg4[%c0_5, %c0_6] : memref<32x32xf32, #tpu.memory_space<vmem>>, vector<32x32xf32>
    %c0_7 = arith.constant 0 : index
    %c0_8 = arith.constant 0 : index
    %13 = vector.load %arg1[%c0_7, %c0_8] : memref<8x1xi32, #tpu.memory_space<vmem>>, vector<8x1xi32>
    %14 = vector.shape_cast %13 : vector<8x1xi32> to vector<1x8x1xi32>
    %15 = tpu.iota {dimensions = array<i32: 0>} : vector<8x8x32xi32>
    %16 = vector.broadcast %14 : vector<1x8x1xi32> to vector<8x8x32xi32>
    %17 = arith.cmpi sgt, %16, %15 : vector<8x8x32xi32>
    %c0_9 = arith.constant 0 : index
    %c0_10 = arith.constant 0 : index
    %18 = vector.load %arg2[%c0_9, %c0_10] : memref<8x32xf32, #tpu.memory_space<vmem>>, vector<8x32xf32>
    %19 = vector.extract_strided_slice %11 {offsets = [0, 0, 0], sizes = [1, 8, 32], strides = [1, 1, 1]} : vector<8x8x32xf32> to vector<1x8x32xf32>
    %20 = vector.shape_cast %19 : vector<1x8x32xf32> to vector<8x32xf32>
    %cst_11 = arith.constant dense<0.000000e+00> : vector<8x32xf32>
    %21 = tpu.matmul %18, %12, %cst_11 {dimension_numbers = #tpu.dot_dimension_numbers<[1], [0], [0], [1], [0, 0, 1, 1], [], []>} : vector<8x32xf32>, vector<32x32xf32>, vector<8x32xf32> -> vector<8x32xf32>
    %22 = arith.addf %20, %21 : vector<8x32xf32>
    %23 = math.tanh %22 : vector<8x32xf32>
    %24 = vector.extract_strided_slice %17 {offsets = [0, 0, 0], sizes = [1, 8, 32], strides = [1, 1, 1]} : vector<8x8x32xi1> to vector<1x8x32xi1>
    %25 = vector.shape_cast %24 : vector<1x8x32xi1> to vector<8x32xi1>
    %26 = arith.select %25, %23, %18 : vector<8x32xi1>, vector<8x32xf32>
    %27 = vector.extract_strided_slice %11 {offsets = [1, 0, 0], sizes = [1, 8, 32], strides = [1, 1, 1]} : vector<8x8x32xf32> to vector<1x8x32xf32>
    %28 = vector.shape_cast %27 : vector<1x8x32xf32> to vector<8x32xf32>
    %cst_12 = arith.constant dense<0.000000e+00> : vector<8x32xf32>
    %29 = tpu.matmul %26, %12, %cst_12 {dimension_numbers = #tpu.dot_dimension_numbers<[1], [0], [0], [1], [0, 0, 1, 1], [], []>} : vector<8x32xf32>, vector<32x32xf32>, vector<8x32xf32> -> vector<8x32xf32>
    %30 = arith.addf %28, %29 : vector<8x32xf32>
    %31 = math.tanh %30 : vector<8x32xf32>
    %32 = vector.extract_strided_slice %17 {offsets = [1, 0, 0], sizes = [1, 8, 32], strides = [1, 1, 1]} : vector<8x8x32xi1> to vector<1x8x32xi1>
    %33 = vector.shape_cast %32 : vector<1x8x32xi1> to vector<8x32xi1>
    %34 = arith.select %33, %31, %26 : vector<8x32xi1>, vector<8x32xf32>
    %35 = vector.extract_strided_slice %11 {offsets = [2, 0, 0], sizes = [1, 8, 32], strides = [1, 1, 1]} : vector<8x8x32xf32> to vector<1x8x32xf32>
    %36 = vector.shape_cast %35 : vector<1x8x32xf32> to vector<8x32xf32>
    %cst_13 = arith.constant dense<0.000000e+00> : vector<8x32xf32>
    %37 = tpu.matmul %34, %12, %cst_13 {dimension_numbers = #tpu.dot_dimension_numbers<[1], [0], [0], [1], [0, 0, 1, 1], [], []>} : vector<8x32xf32>, vector<32x32xf32>, vector<8x32xf32> -> vector<8x32xf32>
    %38 = arith.addf %36, %37 : vector<8x32xf32>
    %39 = math.tanh %38 : vector<8x32xf32>
    %40 = vector.extract_strided_slice %17 {offsets = [2, 0, 0], sizes = [1, 8, 32], strides = [1, 1, 1]} : vector<8x8x32xi1> to vector<1x8x32xi1>
    %41 = vector.shape_cast %40 : vector<1x8x32xi1> to vector<8x32xi1>
    %42 = arith.select %41, %39, %34 : vector<8x32xi1>, vector<8x32xf32>
    %43 = vector.extract_strided_slice %11 {offsets = [3, 0, 0], sizes = [1, 8, 32], strides = [1, 1, 1]} : vector<8x8x32xf32> to vector<1x8x32xf32>
    %44 = vector.shape_cast %43 : vector<1x8x32xf32> to vector<8x32xf32>
    %cst_14 = arith.constant dense<0.000000e+00> : vector<8x32xf32>
    %45 = tpu.matmul %42, %12, %cst_14 {dimension_numbers = #tpu.dot_dimension_numbers<[1], [0], [0], [1], [0, 0, 1, 1], [], []>} : vector<8x32xf32>, vector<32x32xf32>, vector<8x32xf32> -> vector<8x32xf32>
    %46 = arith.addf %44, %45 : vector<8x32xf32>
    %47 = math.tanh %46 : vector<8x32xf32>
    %48 = vector.extract_strided_slice %17 {offsets = [3, 0, 0], sizes = [1, 8, 32], strides = [1, 1, 1]} : vector<8x8x32xi1> to vector<1x8x32xi1>
    %49 = vector.shape_cast %48 : vector<1x8x32xi1> to vector<8x32xi1>
    %50 = arith.select %49, %47, %42 : vector<8x32xi1>, vector<8x32xf32>
    %51 = vector.extract_strided_slice %11 {offsets = [4, 0, 0], sizes = [1, 8, 32], strides = [1, 1, 1]} : vector<8x8x32xf32> to vector<1x8x32xf32>
    %52 = vector.shape_cast %51 : vector<1x8x32xf32> to vector<8x32xf32>
    %cst_15 = arith.constant dense<0.000000e+00> : vector<8x32xf32>
    %53 = tpu.matmul %50, %12, %cst_15 {dimension_numbers = #tpu.dot_dimension_numbers<[1], [0], [0], [1], [0, 0, 1, 1], [], []>} : vector<8x32xf32>, vector<32x32xf32>, vector<8x32xf32> -> vector<8x32xf32>
    %54 = arith.addf %52, %53 : vector<8x32xf32>
    %55 = math.tanh %54 : vector<8x32xf32>
    %56 = vector.extract_strided_slice %17 {offsets = [4, 0, 0], sizes = [1, 8, 32], strides = [1, 1, 1]} : vector<8x8x32xi1> to vector<1x8x32xi1>
    %57 = vector.shape_cast %56 : vector<1x8x32xi1> to vector<8x32xi1>
    %58 = arith.select %57, %55, %50 : vector<8x32xi1>, vector<8x32xf32>
    %59 = vector.extract_strided_slice %11 {offsets = [5, 0, 0], sizes = [1, 8, 32], strides = [1, 1, 1]} : vector<8x8x32xf32> to vector<1x8x32xf32>
    %60 = vector.shape_cast %59 : vector<1x8x32xf32> to vector<8x32xf32>
    %cst_16 = arith.constant dense<0.000000e+00> : vector<8x32xf32>
    %61 = tpu.matmul %58, %12, %cst_16 {dimension_numbers = #tpu.dot_dimension_numbers<[1], [0], [0], [1], [0, 0, 1, 1], [], []>} : vector<8x32xf32>, vector<32x32xf32>, vector<8x32xf32> -> vector<8x32xf32>
    %62 = arith.addf %60, %61 : vector<8x32xf32>
    %63 = math.tanh %62 : vector<8x32xf32>
    %64 = vector.extract_strided_slice %17 {offsets = [5, 0, 0], sizes = [1, 8, 32], strides = [1, 1, 1]} : vector<8x8x32xi1> to vector<1x8x32xi1>
    %65 = vector.shape_cast %64 : vector<1x8x32xi1> to vector<8x32xi1>
    %66 = arith.select %65, %63, %58 : vector<8x32xi1>, vector<8x32xf32>
    %67 = vector.extract_strided_slice %11 {offsets = [6, 0, 0], sizes = [1, 8, 32], strides = [1, 1, 1]} : vector<8x8x32xf32> to vector<1x8x32xf32>
    %68 = vector.shape_cast %67 : vector<1x8x32xf32> to vector<8x32xf32>
    %cst_17 = arith.constant dense<0.000000e+00> : vector<8x32xf32>
    %69 = tpu.matmul %66, %12, %cst_17 {dimension_numbers = #tpu.dot_dimension_numbers<[1], [0], [0], [1], [0, 0, 1, 1], [], []>} : vector<8x32xf32>, vector<32x32xf32>, vector<8x32xf32> -> vector<8x32xf32>
    %70 = arith.addf %68, %69 : vector<8x32xf32>
    %71 = math.tanh %70 : vector<8x32xf32>
    %72 = vector.extract_strided_slice %17 {offsets = [6, 0, 0], sizes = [1, 8, 32], strides = [1, 1, 1]} : vector<8x8x32xi1> to vector<1x8x32xi1>
    %73 = vector.shape_cast %72 : vector<1x8x32xi1> to vector<8x32xi1>
    %74 = arith.select %73, %71, %66 : vector<8x32xi1>, vector<8x32xf32>
    %75 = vector.extract_strided_slice %11 {offsets = [7, 0, 0], sizes = [1, 8, 32], strides = [1, 1, 1]} : vector<8x8x32xf32> to vector<1x8x32xf32>
    %76 = vector.shape_cast %75 : vector<1x8x32xf32> to vector<8x32xf32>
    %cst_18 = arith.constant dense<0.000000e+00> : vector<8x32xf32>
    %77 = tpu.matmul %74, %12, %cst_18 {dimension_numbers = #tpu.dot_dimension_numbers<[1], [0], [0], [1], [0, 0, 1, 1], [], []>} : vector<8x32xf32>, vector<32x32xf32>, vector<8x32xf32> -> vector<8x32xf32>
    %78 = arith.addf %76, %77 : vector<8x32xf32>
    %79 = math.tanh %78 : vector<8x32xf32>
    %80 = vector.extract_strided_slice %17 {offsets = [7, 0, 0], sizes = [1, 8, 32], strides = [1, 1, 1]} : vector<8x8x32xi1> to vector<1x8x32xi1>
    %81 = vector.shape_cast %80 : vector<1x8x32xi1> to vector<8x32xi1>
    %82 = arith.select %81, %79, %74 : vector<8x32xi1>, vector<8x32xf32>
    %c0_19 = arith.constant 0 : index
    %c0_20 = arith.constant 0 : index
    %83 = vector.load %arg6[%c0_19, %c0_20] : memref<32x128xf32, #tpu.memory_space<vmem>>, vector<32x128xf32>
    %cst_21 = arith.constant dense<0.000000e+00> : vector<8x128xf32>
    %84 = tpu.matmul %82, %83, %cst_21 {dimension_numbers = #tpu.dot_dimension_numbers<[1], [0], [0], [1], [0, 0, 1, 1], [], []>} : vector<8x32xf32>, vector<32x128xf32>, vector<8x128xf32> -> vector<8x128xf32>
    %c0_22 = arith.constant 0 : index
    %c0_23 = arith.constant 0 : index
    %85 = vector.load %arg7[%c0_22, %c0_23] : memref<1x128xf32, #tpu.memory_space<vmem>>, vector<1x128xf32>
    %86 = vector.broadcast %85 : vector<1x128xf32> to vector<8x128xf32>
    %87 = arith.addf %84, %86 : vector<8x128xf32>
    %c0_24 = arith.constant 0 : index
    %c0_25 = arith.constant 0 : index
    %88 = vector.load %arg8[%c0_24, %c0_25] : memref<8x128xf32, #tpu.memory_space<vmem>>, vector<8x128xf32>
    tpu.vector_store %arg8[%c0_24, %c0_25], %87 {strides = array<i32>} : memref<8x128xf32, #tpu.memory_space<vmem>>, vector<8x128xf32>,
    return
  }
}

</mosaic_0001>

<llo_original>
// kernel: tpu_custom_call.1
$region0: #{tpu_custom_call.1}
  #allocation0 [shape = 'u32[]', space=smem, size = 0x4, offset = 0x4, fixed_abs, tag = 'smem constant byte address 0x4 - core index']
  #allocation1 [shape = 'u32[144,128]{1,0:T(1,128)}', space=vmem, size = 0x12000, scoped, tag = 'internal scratch']
  %s0 = inlined_call_operand.vmem [shape: s32[64,1], index: 0, kind: input, shape index: {}]
  %s1 = inlined_call_operand.vmem [shape: s32[8,1], index: 1, kind: input, shape index: {}]
  %s2 = inlined_call_operand.vmem [shape: f32[8,32], index: 2, kind: input, shape index: {}]
  %s3 = inlined_call_operand.vmem [shape: f32[56,32], index: 3, kind: input, shape index: {}]
  %s4 = inlined_call_operand.vmem [shape: f32[32,32], index: 4, kind: input, shape index: {}]
  %s5 = inlined_call_operand.vmem [shape: f32[1,32], index: 5, kind: input, shape index: {}]
  %s6 = inlined_call_operand.vmem [shape: f32[32,128], index: 6, kind: input, shape index: {}]
  %s7 = inlined_call_operand.vmem [shape: f32[1,128], index: 7, kind: input, shape index: {}]
  %s8 = inlined_call_operand.hbm [shape: f32[8,128], index: 8, kind: output, shape index: {}]
  %s9 = sld [smem:[#allocation0]]
  $region42: #{tpu_custom_call.1} parent=0
    _
  %s11 = ssub.s32 1, %s9
  %s12 = scalar_select 0, %s11, %s9
  $region1: #{tpu_custom_call.1} parent=0
    #allocation2 [shape = 'u8[4096]{0}', space=vmem, size = 0x1000, scoped, tag = 'output window, operand 0, single buffered']
    #allocation3 [shape = 's32[1]{0}', space=sflag, size = 0x4, scoped, tag = 'scoped memory for tpu_custom_call.1']
    %13 = vsyncpa [#allocation3], 0
    // Predicated region
    $region2: #{tpu_custom_call.1} parent=1 // pred_check
      _
    $region3: #{tpu_custom_call.1} parent=1 // pred_check_branch
      %15 = sbr.rel (0) target = $region5
    $region4: #{tpu_custom_call.1} parent=1 // pred_region
      _
    $region5: #{tpu_custom_call.1} parent=1 // pred_fallthru
      _
    // Predicated region
    $region6: #{tpu_custom_call.1} parent=1 // pred_check
      _
    $region7: #{tpu_custom_call.1} parent=1 // pred_check_branch
      %17 = sbr.rel (0) target = $region9
    $region8: #{tpu_custom_call.1} parent=1 // pred_region
      _
    $region9: #{tpu_custom_call.1} parent=1 // pred_fallthru
      _
    // Predicated region
    $region10: #{tpu_custom_call.1} parent=1 // pred_check
      _
    $region11: #{tpu_custom_call.1} parent=1 // pred_check_branch
      %19 = sbr.rel (0) target = $region13
    $region12: #{tpu_custom_call.1} parent=1 // pred_region
      _
    $region13: #{tpu_custom_call.1} parent=1 // pred_fallthru
      _
    // Predicated region
    $region14: #{tpu_custom_call.1} parent=1 // pred_check
      _
    $region15: #{tpu_custom_call.1} parent=1 // pred_check_branch
      %21 = sbr.rel (0) target = $region17
    $region16: #{tpu_custom_call.1} parent=1 // pred_region
      _
    $region17: #{tpu_custom_call.1} parent=1 // pred_fallthru
      _
    // Predicated region
    $region18: #{tpu_custom_call.1} parent=1 // pred_check
      _
    $region19: #{tpu_custom_call.1} parent=1 // pred_check_branch
      %23 = sbr.rel (0) target = $region21
    $region20: #{tpu_custom_call.1} parent=1 // pred_region
      _
    $region21: #{tpu_custom_call.1} parent=1 // pred_fallthru
      _
    // Predicated region
    $region22: #{tpu_custom_call.1} parent=1 // pred_check
      _
    $region23: #{tpu_custom_call.1} parent=1 // pred_check_branch
      %25 = sbr.rel (0) target = $region25
    $region24: #{tpu_custom_call.1} parent=1 // pred_region
      _
    $region25: #{tpu_custom_call.1} parent=1 // pred_fallthru
      _
    // Predicated region
    $region26: #{tpu_custom_call.1} parent=1 // pred_check
      _
    $region27: #{tpu_custom_call.1} parent=1 // pred_check_branch
      %27 = sbr.rel (0) target = $region29
    $region28: #{tpu_custom_call.1} parent=1 // pred_region
      _
    $region29: #{tpu_custom_call.1} parent=1 // pred_fallthru
      _
    // Predicated region
    $region30: #{tpu_custom_call.1} parent=1 // pred_check
      _
    $region31: #{tpu_custom_call.1} parent=1 // pred_check_branch
      %29 = sbr.rel (0) target = $region33
    $region32: #{tpu_custom_call.1} parent=1 // pred_region
      _
    $region33: #{tpu_custom_call.1} parent=1 // pred_fallthru
      _
    %v30 = vld [vmem:[%s0] sm:$0xff]
    %v31 = vld [vmem:[%s0 + $0x8] sm:$0xff]
    %v32 = vld [vmem:[%s0 + $0x10] sm:$0xff]
    %v33 = vld [vmem:[%s0 + $0x18] sm:$0xff]
    %v34 = vld [vmem:[%s0 + $0x20] sm:$0xff]
    %v35 = vld [vmem:[%s0 + $0x28] sm:$0xff]
    %v36 = vld [vmem:[%s0 + $0x30] sm:$0xff]
    %v37 = vld [vmem:[%s0 + $0x38] sm:$0xff]
    %v38 = vlaneseq
    %v39 = vand.u32 %v38, 127
    %40 = vset.pattern.permute.xlu0 0
    %41 = vperm.xlu0 %40, %v30
    %v42 = vpop.permute.xlu0 %41
    %43 = vset.pattern.permute.xlu0 0
    %44 = vperm.xlu0 %43, %v31
    %v45 = vpop.permute.xlu0 %44
    %46 = vset.pattern.permute.xlu0 0
    %47 = vperm.xlu0 %46, %v32
    %v48 = vpop.permute.xlu0 %47
    %49 = vset.pattern.permute.xlu0 0
    %50 = vperm.xlu0 %49, %v33
    %v51 = vpop.permute.xlu0 %50
    %52 = vset.pattern.permute.xlu0 0
    %53 = vperm.xlu0 %52, %v34
    %v54 = vpop.permute.xlu0 %53
    %55 = vset.pattern.permute.xlu0 0
    %56 = vperm.xlu0 %55, %v35
    %v57 = vpop.permute.xlu0 %56
    %58 = vset.pattern.permute.xlu0 0
    %59 = vperm.xlu0 %58, %v36
    %v60 = vpop.permute.xlu0 %59
    %61 = vset.pattern.permute.xlu0 0
    %62 = vperm.xlu0 %61, %v37
    %v63 = vpop.permute.xlu0 %62
    %vm64 = vcmp.eq.s32.totalorder %v42, %v39
    %vm65 = vcmp.eq.s32.totalorder %v45, %v39
    %vm66 = vcmp.eq.s32.totalorder %v48, %v39
    %vm67 = vcmp.eq.s32.totalorder %v51, %v39
    %vm68 = vcmp.eq.s32.totalorder %v54, %v39
    %vm69 = vcmp.eq.s32.totalorder %v57, %v39
    %vm70 = vcmp.eq.s32.totalorder %v60, %v39
    %vm71 = vcmp.eq.s32.totalorder %v63, %v39
    %v72 = vsel %vm64, 1, 0
    %v73 = vsel %vm65, 1, 0
    %v74 = vsel %vm66, 1, 0
    %v75 = vsel %vm67, 1, 0
    %v76 = vsel %vm68, 1, 0
    %v77 = vsel %vm69, 1, 0
    %v78 = vsel %vm70, 1, 0
    %v79 = vsel %vm71, 1, 0
    %v80 = vcvt.s32.f32 %v72
    %v81 = vcvt.s32.f32 %v73
    %v82 = vcvt.s32.f32 %v74
    %v83 = vcvt.s32.f32 %v75
    %v84 = vcvt.s32.f32 %v76
    %v85 = vcvt.s32.f32 %v77
    %v86 = vcvt.s32.f32 %v78
    %v87 = vcvt.s32.f32 %v79
    %v88 = vld [vmem:[%s3] sm:$0xff]
    %v89 = vld [vmem:[%s3 + $0x8] sm:$0xff]
    %v90 = vld [vmem:[%s3 + $0x10] sm:$0xff]
    %v91 = vld [vmem:[%s3 + $0x18] sm:$0xff]
    %v92 = vld [vmem:[%s3 + $0x20] sm:$0xff]
    %v93 = vld [vmem:[%s3 + $0x28] sm:$0xff]
    %v94 = vld [vmem:[%s3 + $0x30] sm:$0xff]
    %v95 = vld [vmem:[%s5] sm:$0x1]
    %v97 = vlaneseq
    %v98 = vshrl.u32 %v97, 7
    %v99 = vsub.s32 0, %v98
    %v100 = vrot.slane %v95, %v99
    %vm102 = vcmask 457728
    %v104 = vsel %vm102, %v80, 0
    %v107 = vsel %vm102, %v81, 0
    %v110 = vsel %vm102, %v82, 0
    %v113 = vsel %vm102, %v83, 0
    %v116 = vsel %vm102, %v84, 0
    %v119 = vsel %vm102, %v85, 0
    %v122 = vsel %vm102, %v86, 0
    %v125 = vsel %vm102, %v87, 0
    %127 = vmatprep.subr.mxu0 0.0
    %128 = vmatpush1.msra.mxu0 0.0
    %129 = vmatprep.subr.mxu0 0.0
    %130 = vmatpush1.msra.mxu0 0.0
    %131 = vmatprep.subr.mxu0 0.0
    %132 = vmatpush1.msra.mxu0 0.0
    %133 = vmatprep.subr.mxu0 0.0
    %134 = vmatpush1.msra.mxu0 0.0
    %135 = vmatprep.subr.mxu0 0.0
    %136 = vmatpush1.msra.mxu0 0.0
    %137 = vmatprep.subr.mxu0 0.0
    %138 = vmatpush1.msra.mxu0 0.0
    %139 = vmatprep.subr.mxu0 0.0
    %140 = vmatpush1.msra.mxu0 0.0
    %141 = vmatprep.subr.mxu0 0.0
    %142 = vmatpush1.msra.mxu0 0.0
    %143 = vmatprep.subr.mxu0 0.0
    %144 = vmatpush1.msra.mxu0 0.0
    %145 = vmatprep.subr.mxu0 0.0
    %146 = vmatpush1.msra.mxu0 %v94
    %147 = vmatprep.subr.mxu0 0.0
    %148 = vmatpush1.msra.mxu0 %v93
    %149 = vmatprep.subr.mxu0 0.0
    %150 = vmatpush1.msra.mxu0 %v92
    %151 = vmatprep.subr.mxu0 0.0
    %152 = vmatpush1.msra.mxu0 %v91
    %153 = vmatprep.subr.mxu0 0.0
    %154 = vmatpush1.msra.mxu0 %v90
    %155 = vmatprep.subr.mxu0 0.0
    %156 = vmatpush1.msra.mxu0 %v89
    %157 = vmatprep.subr.mxu0 0.0
    %158 = vmatpush1.msra.mxu0 %v88
    %159 = vmatprep.subr.mxu0 0.0
    %160 = vmatpush2.msra.mxu0 0.0
    %161 = vmatprep.subr.mxu0 0.0
    %162 = vmatpush2.msra.mxu0 0.0
    %163 = vmatprep.subr.mxu0 0.0
    %164 = vmatpush2.msra.mxu0 0.0
    %165 = vmatprep.subr.mxu0 0.0
    %166 = vmatpush2.msra.mxu0 0.0
    %167 = vmatprep.subr.mxu0 0.0
    %168 = vmatpush2.msra.mxu0 0.0
    %169 = vmatprep.subr.mxu0 0.0
    %170 = vmatpush2.msra.mxu0 0.0
    %171 = vmatprep.subr.mxu0 0.0
    %172 = vmatpush2.msra.mxu0 0.0
    %173 = vmatprep.subr.mxu0 0.0
    %174 = vmatpush2.msra.mxu0 0.0
    %175 = vmatprep.subr.mxu0 0.0
    %176 = vmatpush2.msra.mxu0 0.0
    %177 = vmatprep.subr.mxu0 0.0
    %178 = vmatpush2.msra.mxu0 0.0
    %179 = vmatprep.subr.mxu0 0.0
    %180 = vmatpush2.msra.mxu0 0.0
    %181 = vmatprep.subr.mxu0 0.0
    %182 = vmatpush2.msra.mxu0 0.0
    %183 = vmatprep.subr.mxu0 0.0
    %184 = vmatpush2.msra.mxu0 0.0
    %185 = vmatprep.subr.mxu0 0.0
    %186 = vmatpush2.msra.mxu0 0.0
    %187 = vmatprep.subr.mxu0 0.0
    %188 = vmatpush2.msra.mxu0 0.0
    %189 = vmatprep.subr.mxu0 0.0
    %190 = vmatpush2.msra.mxu0 0.0
    %191 = vmatprep.mubr.f32.mxu0 0.0
    %192 = vmatmul.mubr.f32.gmra.mxu0 %v104
    %v193 = vpop.f32.mrf.mxu0
    %v194 = vadd.f32 %v100, %v193
    %v195 = vpop.f32.mrf.mxu0
    %196 = vmatprep.mubr.f32.mxu0 0.0
    %197 = vmatmul.mubr.f32.gmra.mxu0 %v107
    %v198 = vpop.f32.mrf.mxu0
    %v199 = vadd.f32 %v100, %v198
    %v200 = vpop.f32.mrf.mxu0
    %201 = vmatprep.mubr.f32.mxu0 0.0
    %202 = vmatmul.mubr.f32.gmra.mxu0 %v110
    %v203 = vpop.f32.mrf.mxu0
    %v204 = vadd.f32 %v100, %v203
    %v205 = vpop.f32.mrf.mxu0
    %206 = vmatprep.mubr.f32.mxu0 0.0
    %207 = vmatmul.mubr.f32.gmra.mxu0 %v113
    %v208 = vpop.f32.mrf.mxu0
    %v209 = vadd.f32 %v100, %v208
    %v210 = vpop.f32.mrf.mxu0
    %211 = vmatprep.mubr.f32.mxu0 0.0
    %212 = vmatmul.mubr.f32.gmra.mxu0 %v116
    %v213 = vpop.f32.mrf.mxu0
    %v214 = vadd.f32 %v100, %v213
    %v215 = vpop.f32.mrf.mxu0
    %216 = vmatprep.mubr.f32.mxu0 0.0
    %217 = vmatmul.mubr.f32.gmra.mxu0 %v119
    %v218 = vpop.f32.mrf.mxu0
    %v219 = vadd.f32 %v100, %v218
    %v220 = vpop.f32.mrf.mxu0
    %221 = vmatprep.mubr.f32.mxu0 0.0
    %222 = vmatmul.mubr.f32.gmra.mxu0 %v122
    %v223 = vpop.f32.mrf.mxu0
    %v224 = vadd.f32 %v100, %v223
    %v225 = vpop.f32.mrf.mxu0
    %226 = vmatprep.mubr.f32.mxu0 0.0
    %227 = vmatmul.mubr.f32.gmra.mxu0 %v125
    %v228 = vpop.f32.mrf.mxu0
    %v229 = vadd.f32 %v100, %v228
    %v230 = vpop.f32.mrf.mxu0
    %231 = vdwg.mxu0
    %v232 = vld [vmem:[%s4] sm:$0xff]
    %v233 = vld [vmem:[%s4 + $0x8] sm:$0xff]
    %v234 = vld [vmem:[%s4 + $0x10] sm:$0xff]
    %v235 = vld [vmem:[%s4 + $0x18] sm:$0xff]
    %v236 = vld [vmem:[%s1] sm:$0xff]
    %237 = vset.pattern.permute.xlu0 0
    %238 = vperm.xlu0 %237, %v236
    %v239 = vpop.permute.xlu0 %238
    %vm240 = vcmp.gt.s32.totalorder %v239, 0
    %vm241 = vcmp.gt.s32.totalorder %v239, 1
    %vm242 = vcmp.gt.s32.totalorder %v239, 2
    %vm243 = vcmp.gt.s32.totalorder %v239, 3
    %vm244 = vcmp.gt.s32.totalorder %v239, 4
    %vm245 = vcmp.gt.s32.totalorder %v239, 5
    %vm246 = vcmp.gt.s32.totalorder %v239, 6
    %vm247 = vcmp.gt.s32.totalorder %v239, 7
    %v248 = vld [vmem:[%s2] sm:$0xff]
    %vm249 = vcmask 261120
    %v251 = vsel %vm249, %v248, 0
    %253 = vmatprep.subr.mxu0 0.0
    %254 = vmatpush1.msra.mxu0 0.0
    %255 = vmatprep.subr.mxu0 0.0
    %256 = vmatpush1.msra.mxu0 0.0
    %257 = vmatprep.subr.mxu0 0.0
    %258 = vmatpush1.msra.mxu0 0.0
    %259 = vmatprep.subr.mxu0 0.0
    %260 = vmatpush1.msra.mxu0 0.0
    %261 = vmatprep.subr.mxu0 0.0
    %262 = vmatpush1.msra.mxu0 0.0
    %263 = vmatprep.subr.mxu0 0.0
    %264 = vmatpush1.msra.mxu0 0.0
    %265 = vmatprep.subr.mxu0 0.0
    %266 = vmatpush1.msra.mxu0 0.0
    %267 = vmatprep.subr.mxu0 0.0
    %268 = vmatpush1.msra.mxu0 0.0
    %269 = vmatprep.subr.mxu0 0.0
    %270 = vmatpush1.msra.mxu0 0.0
    %271 = vmatprep.subr.mxu0 0.0
    %272 = vmatpush1.msra.mxu0 0.0
    %273 = vmatprep.subr.mxu0 0.0
    %274 = vmatpush1.msra.mxu0 0.0
    %275 = vmatprep.subr.mxu0 0.0
    %276 = vmatpush1.msra.mxu0 0.0
    %277 = vmatprep.subr.mxu0 0.0
    %278 = vmatpush1.msra.mxu0 %v235
    %279 = vmatprep.subr.mxu0 0.0
    %280 = vmatpush1.msra.mxu0 %v234
    %281 = vmatprep.subr.mxu0 0.0
    %282 = vmatpush1.msra.mxu0 %v233
    %283 = vmatprep.subr.mxu0 0.0
    %284 = vmatpush1.msra.mxu0 %v232
    %285 = vmatprep.subr.mxu0 0.0
    %286 = vmatpush2.msra.mxu0 0.0
    %287 = vmatprep.subr.mxu0 0.0
    %288 = vmatpush2.msra.mxu0 0.0
    %289 = vmatprep.subr.mxu0 0.0
    %290 = vmatpush2.msra.mxu0 0.0
    %291 = vmatprep.subr.mxu0 0.0
    %292 = vmatpush2.msra.mxu0 0.0
    %293 = vmatprep.subr.mxu0 0.0
    %294 = vmatpush2.msra.mxu0 0.0
    %295 = vmatprep.subr.mxu0 0.0
    %296 = vmatpush2.msra.mxu0 0.0
    %297 = vmatprep.subr.mxu0 0.0
    %298 = vmatpush2.msra.mxu0 0.0
    %299 = vmatprep.subr.mxu0 0.0
    %300 = vmatpush2.msra.mxu0 0.0
    %301 = vmatprep.subr.mxu0 0.0
    %302 = vmatpush2.msra.mxu0 0.0
    %303 = vmatprep.subr.mxu0 0.0
    %304 = vmatpush2.msra.mxu0 0.0
    %305 = vmatprep.subr.mxu0 0.0
    %306 = vmatpush2.msra.mxu0 0.0
    %307 = vmatprep.subr.mxu0 0.0
    %308 = vmatpush2.msra.mxu0 0.0
    %309 = vmatprep.subr.mxu0 0.0
    %310 = vmatpush2.msra.mxu0 0.0
    %311 = vmatprep.subr.mxu0 0.0
    %312 = vmatpush2.msra.mxu0 0.0
    %313 = vmatprep.subr.mxu0 0.0
    %314 = vmatpush2.msra.mxu0 0.0
    %315 = vmatprep.subr.mxu0 0.0
    %316 = vmatpush2.msra.mxu0 0.0
    %317 = vmatprep.mubr.f32.mxu0 0.0
    %318 = vmatmul.mubr.f32.gmra.mxu0 %v251
    %v319 = vpop.f32.mrf.mxu0
    %v320 = vadd.f32 0.0, %v319
    %v321 = vpop.f32.mrf.mxu0
    %322 = vdwg.mxu0
    %v323 = vadd.f32 %v194, %v320
    %v324 = vtanh.pop %v323
    %v325 = vsel %vm240, %v324, %v248
    %v327 = vsel %vm249, %v325, 0
    %329 = vmatprep.subr.mxu0 0.0
    %330 = vmatpush1.msra.mxu0 0.0
    %331 = vmatprep.subr.mxu0 0.0
    %332 = vmatpush1.msra.mxu0 0.0
    %333 = vmatprep.subr.mxu0 0.0
    %334 = vmatpush1.msra.mxu0 0.0
    %335 = vmatprep.subr.mxu0 0.0
    %336 = vmatpush1.msra.mxu0 0.0
    %337 = vmatprep.subr.mxu0 0.0
    %338 = vmatpush1.msra.mxu0 0.0
    %339 = vmatprep.subr.mxu0 0.0
    %340 = vmatpush1.msra.mxu0 0.0
    %341 = vmatprep.subr.mxu0 0.0
    %342 = vmatpush1.msra.mxu0 0.0
    %343 = vmatprep.subr.mxu0 0.0
    %344 = vmatpush1.msra.mxu0 0.0
    %345 = vmatprep.subr.mxu0 0.0
    %346 = vmatpush1.msra.mxu0 0.0
    %347 = vmatprep.subr.mxu0 0.0
    %348 = vmatpush1.msra.mxu0 0.0
    %349 = vmatprep.subr.mxu0 0.0
    %350 = vmatpush1.msra.mxu0 0.0
    %351 = vmatprep.subr.mxu0 0.0
    %352 = vmatpush1.msra.mxu0 0.0
    %353 = vmatprep.subr.mxu0 0.0
    %354 = vmatpush1.msra.mxu0 %v235
    %355 = vmatprep.subr.mxu0 0.0
    %356 = vmatpush1.msra.mxu0 %v234
    %357 = vmatprep.subr.mxu0 0.0
    %358 = vmatpush1.msra.mxu0 %v233
    %359 = vmatprep.subr.mxu0 0.0
    %360 = vmatpush1.msra.mxu0 %v232
    %361 = vmatprep.subr.mxu0 0.0
    %362 = vmatpush2.msra.mxu0 0.0
    %363 = vmatprep.subr.mxu0 0.0
    %364 = vmatpush2.msra.mxu0 0.0
    %365 = vmatprep.subr.mxu0 0.0
    %366 = vmatpush2.msra.mxu0 0.0
    %367 = vmatprep.subr.mxu0 0.0
    %368 = vmatpush2.msra.mxu0 0.0
    %369 = vmatprep.subr.mxu0 0.0
    %370 = vmatpush2.msra.mxu0 0.0
    %371 = vmatprep.subr.mxu0 0.0
    %372 = vmatpush2.msra.mxu0 0.0
    %373 = vmatprep.subr.mxu0 0.0
    %374 = vmatpush2.msra.mxu0 0.0
    %375 = vmatprep.subr.mxu0 0.0
    %376 = vmatpush2.msra.mxu0 0.0
    %377 = vmatprep.subr.mxu0 0.0
    %378 = vmatpush2.msra.mxu0 0.0
    %379 = vmatprep.subr.mxu0 0.0
    %380 = vmatpush2.msra.mxu0 0.0
    %381 = vmatprep.subr.mxu0 0.0
    %382 = vmatpush2.msra.mxu0 0.0
    %383 = vmatprep.subr.mxu0 0.0
    %384 = vmatpush2.msra.mxu0 0.0
    %385 = vmatprep.subr.mxu0 0.0
    %386 = vmatpush2.msra.mxu0 0.0
    %387 = vmatprep.subr.mxu0 0.0
    %388 = vmatpush2.msra.mxu0 0.0
    %389 = vmatprep.subr.mxu0 0.0
    %390 = vmatpush2.msra.mxu0 0.0
    %391 = vmatprep.subr.mxu0 0.0
    %392 = vmatpush2.msra.mxu0 0.0
    %393 = vmatprep.mubr.f32.mxu0 0.0
    %394 = vmatmul.mubr.f32.gmra.mxu0 %v327
    %v395 = vpop.f32.mrf.mxu0
    %v396 = vadd.f32 0.0, %v395
    %v397 = vpop.f32.mrf.mxu0
    %398 = vdwg.mxu0
    %v399 = vadd.f32 %v199, %v396
    %v400 = vtanh.pop %v399
    %v401 = vsel %vm241, %v400, %v325
    %v403 = vsel %vm249, %v401, 0
    %405 = vmatprep.subr.mxu0 0.0
    %406 = vmatpush1.msra.mxu0 0.0
    %407 = vmatprep.subr.mxu0 0.0
    %408 = vmatpush1.msra.mxu0 0.0
    %409 = vmatprep.subr.mxu0 0.0
    %410 = vmatpush1.msra.mxu0 0.0
    %411 = vmatprep.subr.mxu0 0.0
    %412 = vmatpush1.msra.mxu0 0.0
    %413 = vmatprep.subr.mxu0 0.0
    %414 = vmatpush1.msra.mxu0 0.0
    %415 = vmatprep.subr.mxu0 0.0
    %416 = vmatpush1.msra.mxu0 0.0
    %417 = vmatprep.subr.mxu0 0.0
    %418 = vmatpush1.msra.mxu0 0.0
    %419 = vmatprep.subr.mxu0 0.0
    %420 = vmatpush1.msra.mxu0 0.0
    %421 = vmatprep.subr.mxu0 0.0
    %422 = vmatpush1.msra.mxu0 0.0
    %423 = vmatprep.subr.mxu0 0.0
    %424 = vmatpush1.msra.mxu0 0.0
    %425 = vmatprep.subr.mxu0 0.0
    %426 = vmatpush1.msra.mxu0 0.0
    %427 = vmatprep.subr.mxu0 0.0
    %428 = vmatpush1.msra.mxu0 0.0
    %429 = vmatprep.subr.mxu0 0.0
    %430 = vmatpush1.msra.mxu0 %v235
    %431 = vmatprep.subr.mxu0 0.0
    %432 = vmatpush1.msra.mxu0 %v234
    %433 = vmatprep.subr.mxu0 0.0
    %434 = vmatpush1.msra.mxu0 %v233
    %435 = vmatprep.subr.mxu0 0.0
    %436 = vmatpush1.msra.mxu0 %v232
    %437 = vmatprep.subr.mxu0 0.0
    %438 = vmatpush2.msra.mxu0 0.0
    %439 = vmatprep.subr.mxu0 0.0
    %440 = vmatpush2.msra.mxu0 0.0
    %441 = vmatprep.subr.mxu0 0.0
    %442 = vmatpush2.msra.mxu0 0.0
    %443 = vmatprep.subr.mxu0 0.0
    %444 = vmatpush2.msra.mxu0 0.0
    %445 = vmatprep.subr.mxu0 0.0
    %446 = vmatpush2.msra.mxu0 0.0
    %447 = vmatprep.subr.mxu0 0.0
    %448 = vmatpush2.msra.mxu0 0.0
    %449 = vmatprep.subr.mxu0 0.0
    %450 = vmatpush2.msra.mxu0 0.0
    %451 = vmatprep.subr.mxu0 0.0
    %452 = vmatpush2.msra.mxu0 0.0
    %453 = vmatprep.subr.mxu0 0.0
    %454 = vmatpush2.msra.mxu0 0.0
    %455 = vmatprep.subr.mxu0 0.0
    %456 = vmatpush2.msra.mxu0 0.0
    %457 = vmatprep.subr.mxu0 0.0
    %458 = vmatpush2.msra.mxu0 0.0
    %459 = vmatprep.subr.mxu0 0.0
    %460 = vmatpush2.msra.mxu0 0.0
    %461 = vmatprep.subr.mxu0 0.0
    %462 = vmatpush2.msra.mxu0 0.0
    %463 = vmatprep.subr.mxu0 0.0
    %464 = vmatpush2.msra.mxu0 0.0
    %465 = vmatprep.subr.mxu0 0.0
    %466 = vmatpush2.msra.mxu0 0.0
    %467 = vmatprep.subr.mxu0 0.0
    %468 = vmatpush2.msra.mxu0 0.0
    %469 = vmatprep.mubr.f32.mxu0 0.0
    %470 = vmatmul.mubr.f32.gmra.mxu0 %v403
    %v471 = vpop.f32.mrf.mxu0
    %v472 = vadd.f32 0.0, %v471
    %v473 = vpop.f32.mrf.mxu0
    %474 = vdwg.mxu0
    %v475 = vadd.f32 %v204, %v472
    %v476 = vtanh.pop %v475
    %v477 = vsel %vm242, %v476, %v401
    %v479 = vsel %vm249, %v477, 0
    %481 = vmatprep.subr.mxu0 0.0
    %482 = vmatpush1.msra.mxu0 0.0
    %483 = vmatprep.subr.mxu0 0.0
    %484 = vmatpush1.msra.mxu0 0.0
    %485 = vmatprep.subr.mxu0 0.0
    %486 = vmatpush1.msra.mxu0 0.0
    %487 = vmatprep.subr.mxu0 0.0
    %488 = vmatpush1.msra.mxu0 0.0
    %489 = vmatprep.subr.mxu0 0.0
    %490 = vmatpush1.msra.mxu0 0.0
    %491 = vmatprep.subr.mxu0 0.0
    %492 = vmatpush1.msra.mxu0 0.0
    %493 = vmatprep.subr.mxu0 0.0
    %494 = vmatpush1.msra.mxu0 0.0
    %495 = vmatprep.subr.mxu0 0.0
    %496 = vmatpush1.msra.mxu0 0.0
    %497 = vmatprep.subr.mxu0 0.0
    %498 = vmatpush1.msra.mxu0 0.0
    %499 = vmatprep.subr.mxu0 0.0
    %500 = vmatpush1.msra.mxu0 0.0
    %501 = vmatprep.subr.mxu0 0.0
    %502 = vmatpush1.msra.mxu0 0.0
    %503 = vmatprep.subr.mxu0 0.0
    %504 = vmatpush1.msra.mxu0 0.0
    %505 = vmatprep.subr.mxu0 0.0
    %506 = vmatpush1.msra.mxu0 %v235
    %507 = vmatprep.subr.mxu0 0.0
    %508 = vmatpush1.msra.mxu0 %v234
    %509 = vmatprep.subr.mxu0 0.0
    %510 = vmatpush1.msra.mxu0 %v233
    %511 = vmatprep.subr.mxu0 0.0
    %512 = vmatpush1.msra.mxu0 %v232
    %513 = vmatprep.subr.mxu0 0.0
    %514 = vmatpush2.msra.mxu0 0.0
    %515 = vmatprep.subr.mxu0 0.0
    %516 = vmatpush2.msra.mxu0 0.0
    %517 = vmatprep.subr.mxu0 0.0
    %518 = vmatpush2.msra.mxu0 0.0
    %519 = vmatprep.subr.mxu0 0.0
    %520 = vmatpush2.msra.mxu0 0.0
    %521 = vmatprep.subr.mxu0 0.0
    %522 = vmatpush2.msra.mxu0 0.0
    %523 = vmatprep.subr.mxu0 0.0
    %524 = vmatpush2.msra.mxu0 0.0
    %525 = vmatprep.subr.mxu0 0.0
    %526 = vmatpush2.msra.mxu0 0.0
    %527 = vmatprep.subr.mxu0 0.0
    %528 = vmatpush2.msra.mxu0 0.0
    %529 = vmatprep.subr.mxu0 0.0
    %530 = vmatpush2.msra.mxu0 0.0
    %531 = vmatprep.subr.mxu0 0.0
    %532 = vmatpush2.msra.mxu0 0.0
    %533 = vmatprep.subr.mxu0 0.0
    %534 = vmatpush2.msra.mxu0 0.0
    %535 = vmatprep.subr.mxu0 0.0
    %536 = vmatpush2.msra.mxu0 0.0
    %537 = vmatprep.subr.mxu0 0.0
    %538 = vmatpush2.msra.mxu0 0.0
    %539 = vmatprep.subr.mxu0 0.0
    %540 = vmatpush2.msra.mxu0 0.0
    %541 = vmatprep.subr.mxu0 0.0
    %542 = vmatpush2.msra.mxu0 0.0
    %543 = vmatprep.subr.mxu0 0.0
    %544 = vmatpush2.msra.mxu0 0.0
    %545 = vmatprep.mubr.f32.mxu0 0.0
    %546 = vmatmul.mubr.f32.gmra.mxu0 %v479
    %v547 = vpop.f32.mrf.mxu0
    %v548 = vadd.f32 0.0, %v547
    %v549 = vpop.f32.mrf.mxu0
    %550 = vdwg.mxu0
    %v551 = vadd.f32 %v209, %v548
    %v552 = vtanh.pop %v551
    %v553 = vsel %vm243, %v552, %v477
    %v555 = vsel %vm249, %v553, 0
    %557 = vmatprep.subr.mxu0 0.0
    %558 = vmatpush1.msra.mxu0 0.0
    %559 = vmatprep.subr.mxu0 0.0
    %560 = vmatpush1.msra.mxu0 0.0
    %561 = vmatprep.subr.mxu0 0.0
    %562 = vmatpush1.msra.mxu0 0.0
    %563 = vmatprep.subr.mxu0 0.0
    %564 = vmatpush1.msra.mxu0 0.0
    %565 = vmatprep.subr.mxu0 0.0
    %566 = vmatpush1.msra.mxu0 0.0
    %567 = vmatprep.subr.mxu0 0.0
    %568 = vmatpush1.msra.mxu0 0.0
    %569 = vmatprep.subr.mxu0 0.0
    %570 = vmatpush1.msra.mxu0 0.0
    %571 = vmatprep.subr.mxu0 0.0
    %572 = vmatpush1.msra.mxu0 0.0
    %573 = vmatprep.subr.mxu0 0.0
    %574 = vmatpush1.msra.mxu0 0.0
    %575 = vmatprep.subr.mxu0 0.0
    %576 = vmatpush1.msra.mxu0 0.0
    %577 = vmatprep.subr.mxu0 0.0
    %578 = vmatpush1.msra.mxu0 0.0
    %579 = vmatprep.subr.mxu0 0.0
    %580 = vmatpush1.msra.mxu0 0.0
    %581 = vmatprep.subr.mxu0 0.0
    %582 = vmatpush1.msra.mxu0 %v235
    %583 = vmatprep.subr.mxu0 0.0
    %584 = vmatpush1.msra.mxu0 %v234
    %585 = vmatprep.subr.mxu0 0.0
    %586 = vmatpush1.msra.mxu0 %v233
    %587 = vmatprep.subr.mxu0 0.0
    %588 = vmatpush1.msra.mxu0 %v232
    %589 = vmatprep.subr.mxu0 0.0
    %590 = vmatpush2.msra.mxu0 0.0
    %591 = vmatprep.subr.mxu0 0.0
    %592 = vmatpush2.msra.mxu0 0.0
    %593 = vmatprep.subr.mxu0 0.0
    %594 = vmatpush2.msra.mxu0 0.0
    %595 = vmatprep.subr.mxu0 0.0
    %596 = vmatpush2.msra.mxu0 0.0
    %597 = vmatprep.subr.mxu0 0.0
    %598 = vmatpush2.msra.mxu0 0.0
    %599 = vmatprep.subr.mxu0 0.0
    %600 = vmatpush2.msra.mxu0 0.0
    %601 = vmatprep.subr.mxu0 0.0
    %602 = vmatpush2.msra.mxu0 0.0
    %603 = vmatprep.subr.mxu0 0.0
    %604 = vmatpush2.msra.mxu0 0.0
    %605 = vmatprep.subr.mxu0 0.0
    %606 = vmatpush2.msra.mxu0 0.0
    %607 = vmatprep.subr.mxu0 0.0
    %608 = vmatpush2.msra.mxu0 0.0
    %609 = vmatprep.subr.mxu0 0.0
    %610 = vmatpush2.msra.mxu0 0.0
    %611 = vmatprep.subr.mxu0 0.0
    %612 = vmatpush2.msra.mxu0 0.0
    %613 = vmatprep.subr.mxu0 0.0
    %614 = vmatpush2.msra.mxu0 0.0
    %615 = vmatprep.subr.mxu0 0.0
    %616 = vmatpush2.msra.mxu0 0.0
    %617 = vmatprep.subr.mxu0 0.0
    %618 = vmatpush2.msra.mxu0 0.0
    %619 = vmatprep.subr.mxu0 0.0
    %620 = vmatpush2.msra.mxu0 0.0
    %621 = vmatprep.mubr.f32.mxu0 0.0
    %622 = vmatmul.mubr.f32.gmra.mxu0 %v555
    %v623 = vpop.f32.mrf.mxu0
    %v624 = vadd.f32 0.0, %v623
    %v625 = vpop.f32.mrf.mxu0
    %626 = vdwg.mxu0
    %v627 = vadd.f32 %v214, %v624
    %v628 = vtanh.pop %v627
    %v629 = vsel %vm244, %v628, %v553
    %v631 = vsel %vm249, %v629, 0
    %633 = vmatprep.subr.mxu0 0.0
    %634 = vmatpush1.msra.mxu0 0.0
    %635 = vmatprep.subr.mxu0 0.0
    %636 = vmatpush1.msra.mxu0 0.0
    %637 = vmatprep.subr.mxu0 0.0
    %638 = vmatpush1.msra.mxu0 0.0
    %639 = vmatprep.subr.mxu0 0.0
    %640 = vmatpush1.msra.mxu0 0.0
    %641 = vmatprep.subr.mxu0 0.0
    %642 = vmatpush1.msra.mxu0 0.0
    %643 = vmatprep.subr.mxu0 0.0
    %644 = vmatpush1.msra.mxu0 0.0
    %645 = vmatprep.subr.mxu0 0.0
    %646 = vmatpush1.msra.mxu0 0.0
    %647 = vmatprep.subr.mxu0 0.0
    %648 = vmatpush1.msra.mxu0 0.0
    %649 = vmatprep.subr.mxu0 0.0
    %650 = vmatpush1.msra.mxu0 0.0
    %651 = vmatprep.subr.mxu0 0.0
    %652 = vmatpush1.msra.mxu0 0.0
    %653 = vmatprep.subr.mxu0 0.0
    %654 = vmatpush1.msra.mxu0 0.0
    %655 = vmatprep.subr.mxu0 0.0
    %656 = vmatpush1.msra.mxu0 0.0
    %657 = vmatprep.subr.mxu0 0.0
    %658 = vmatpush1.msra.mxu0 %v235
    %659 = vmatprep.subr.mxu0 0.0
    %660 = vmatpush1.msra.mxu0 %v234
    %661 = vmatprep.subr.mxu0 0.0
    %662 = vmatpush1.msra.mxu0 %v233
    %663 = vmatprep.subr.mxu0 0.0
    %664 = vmatpush1.msra.mxu0 %v232
    %665 = vmatprep.subr.mxu0 0.0
    %666 = vmatpush2.msra.mxu0 0.0
    %667 = vmatprep.subr.mxu0 0.0
    %668 = vmatpush2.msra.mxu0 0.0
    %669 = vmatprep.subr.mxu0 0.0
    %670 = vmatpush2.msra.mxu0 0.0
    %671 = vmatprep.subr.mxu0 0.0
    %672 = vmatpush2.msra.mxu0 0.0
    %673 = vmatprep.subr.mxu0 0.0
    %674 = vmatpush2.msra.mxu0 0.0
    %675 = vmatprep.subr.mxu0 0.0
    %676 = vmatpush2.msra.mxu0 0.0
    %677 = vmatprep.subr.mxu0 0.0
    %678 = vmatpush2.msra.mxu0 0.0
    %679 = vmatprep.subr.mxu0 0.0
    %680 = vmatpush2.msra.mxu0 0.0
    %681 = vmatprep.subr.mxu0 0.0
    %682 = vmatpush2.msra.mxu0 0.0
    %683 = vmatprep.subr.mxu0 0.0
    %684 = vmatpush2.msra.mxu0 0.0
    %685 = vmatprep.subr.mxu0 0.0
    %686 = vmatpush2.msra.mxu0 0.0
    %687 = vmatprep.subr.mxu0 0.0
    %688 = vmatpush2.msra.mxu0 0.0
    %689 = vmatprep.subr.mxu0 0.0
    %690 = vmatpush2.msra.mxu0 0.0
    %691 = vmatprep.subr.mxu0 0.0
    %692 = vmatpush2.msra.mxu0 0.0
    %693 = vmatprep.subr.mxu0 0.0
    %694 = vmatpush2.msra.mxu0 0.0
    %695 = vmatprep.subr.mxu0 0.0
    %696 = vmatpush2.msra.mxu0 0.0
    %697 = vmatprep.mubr.f32.mxu0 0.0
    %698 = vmatmul.mubr.f32.gmra.mxu0 %v631
    %v699 = vpop.f32.mrf.mxu0
    %v700 = vadd.f32 0.0, %v699
    %v701 = vpop.f32.mrf.mxu0
    %702 = vdwg.mxu0
    %v703 = vadd.f32 %v219, %v700
    %v704 = vtanh.pop %v703
    %v705 = vsel %vm245, %v704, %v629
    %v707 = vsel %vm249, %v705, 0
    %709 = vmatprep.subr.mxu0 0.0
    %710 = vmatpush1.msra.mxu0 0.0
    %711 = vmatprep.subr.mxu0 0.0
    %712 = vmatpush1.msra.mxu0 0.0
    %713 = vmatprep.subr.mxu0 0.0
    %714 = vmatpush1.msra.mxu0 0.0
    %715 = vmatprep.subr.mxu0 0.0
    %716 = vmatpush1.msra.mxu0 0.0
    %717 = vmatprep.subr.mxu0 0.0
    %718 = vmatpush1.msra.mxu0 0.0
    %719 = vmatprep.subr.mxu0 0.0
    %720 = vmatpush1.msra.mxu0 0.0
    %721 = vmatprep.subr.mxu0 0.0
    %722 = vmatpush1.msra.mxu0 0.0
    %723 = vmatprep.subr.mxu0 0.0
    %724 = vmatpush1.msra.mxu0 0.0
    %725 = vmatprep.subr.mxu0 0.0
    %726 = vmatpush1.msra.mxu0 0.0
    %727 = vmatprep.subr.mxu0 0.0
    %728 = vmatpush1.msra.mxu0 0.0
    %729 = vmatprep.subr.mxu0 0.0
    %730 = vmatpush1.msra.mxu0 0.0
    %731 = vmatprep.subr.mxu0 0.0
    %732 = vmatpush1.msra.mxu0 0.0
    %733 = vmatprep.subr.mxu0 0.0
    %734 = vmatpush1.msra.mxu0 %v235
    %735 = vmatprep.subr.mxu0 0.0
    %736 = vmatpush1.msra.mxu0 %v234
    %737 = vmatprep.subr.mxu0 0.0
    %738 = vmatpush1.msra.mxu0 %v233
    %739 = vmatprep.subr.mxu0 0.0
    %740 = vmatpush1.msra.mxu0 %v232
    %741 = vmatprep.subr.mxu0 0.0
    %742 = vmatpush2.msra.mxu0 0.0
    %743 = vmatprep.subr.mxu0 0.0
    %744 = vmatpush2.msra.mxu0 0.0
    %745 = vmatprep.subr.mxu0 0.0
    %746 = vmatpush2.msra.mxu0 0.0
    %747 = vmatprep.subr.mxu0 0.0
    %748 = vmatpush2.msra.mxu0 0.0
    %749 = vmatprep.subr.mxu0 0.0
    %750 = vmatpush2.msra.mxu0 0.0
    %751 = vmatprep.subr.mxu0 0.0
    %752 = vmatpush2.msra.mxu0 0.0
    %753 = vmatprep.subr.mxu0 0.0
    %754 = vmatpush2.msra.mxu0 0.0
    %755 = vmatprep.subr.mxu0 0.0
    %756 = vmatpush2.msra.mxu0 0.0
    %757 = vmatprep.subr.mxu0 0.0
    %758 = vmatpush2.msra.mxu0 0.0
    %759 = vmatprep.subr.mxu0 0.0
    %760 = vmatpush2.msra.mxu0 0.0
    %761 = vmatprep.subr.mxu0 0.0
    %762 = vmatpush2.msra.mxu0 0.0
    %763 = vmatprep.subr.mxu0 0.0
    %764 = vmatpush2.msra.mxu0 0.0
    %765 = vmatprep.subr.mxu0 0.0
    %766 = vmatpush2.msra.mxu0 0.0
    %767 = vmatprep.subr.mxu0 0.0
    %768 = vmatpush2.msra.mxu0 0.0
    %769 = vmatprep.subr.mxu0 0.0
    %770 = vmatpush2.msra.mxu0 0.0
    %771 = vmatprep.subr.mxu0 0.0
    %772 = vmatpush2.msra.mxu0 0.0
    %773 = vmatprep.mubr.f32.mxu0 0.0
    %774 = vmatmul.mubr.f32.gmra.mxu0 %v707
    %v775 = vpop.f32.mrf.mxu0
    %v776 = vadd.f32 0.0, %v775
    %v777 = vpop.f32.mrf.mxu0
    %778 = vdwg.mxu0
    %v779 = vadd.f32 %v224, %v776
    %v780 = vtanh.pop %v779
    %v781 = vsel %vm246, %v780, %v705
    %v783 = vsel %vm249, %v781, 0
    %785 = vmatprep.subr.mxu0 0.0
    %786 = vmatpush1.msra.mxu0 0.0
    %787 = vmatprep.subr.mxu0 0.0
    %788 = vmatpush1.msra.mxu0 0.0
    %789 = vmatprep.subr.mxu0 0.0
    %790 = vmatpush1.msra.mxu0 0.0
    %791 = vmatprep.subr.mxu0 0.0
    %792 = vmatpush1.msra.mxu0 0.0
    %793 = vmatprep.subr.mxu0 0.0
    %794 = vmatpush1.msra.mxu0 0.0
    %795 = vmatprep.subr.mxu0 0.0
    %796 = vmatpush1.msra.mxu0 0.0
    %797 = vmatprep.subr.mxu0 0.0
    %798 = vmatpush1.msra.mxu0 0.0
    %799 = vmatprep.subr.mxu0 0.0
    %800 = vmatpush1.msra.mxu0 0.0
    %801 = vmatprep.subr.mxu0 0.0
    %802 = vmatpush1.msra.mxu0 0.0
    %803 = vmatprep.subr.mxu0 0.0
    %804 = vmatpush1.msra.mxu0 0.0
    %805 = vmatprep.subr.mxu0 0.0
    %806 = vmatpush1.msra.mxu0 0.0
    %807 = vmatprep.subr.mxu0 0.0
    %808 = vmatpush1.msra.mxu0 0.0
    %809 = vmatprep.subr.mxu0 0.0
    %810 = vmatpush1.msra.mxu0 %v235
    %811 = vmatprep.subr.mxu0 0.0
    %812 = vmatpush1.msra.mxu0 %v234
    %813 = vmatprep.subr.mxu0 0.0
    %814 = vmatpush1.msra.mxu0 %v233
    %815 = vmatprep.subr.mxu0 0.0
    %816 = vmatpush1.msra.mxu0 %v232
    %817 = vmatprep.subr.mxu0 0.0
    %818 = vmatpush2.msra.mxu0 0.0
    %819 = vmatprep.subr.mxu0 0.0
    %820 = vmatpush2.msra.mxu0 0.0
    %821 = vmatprep.subr.mxu0 0.0
    %822 = vmatpush2.msra.mxu0 0.0
    %823 = vmatprep.subr.mxu0 0.0
    %824 = vmatpush2.msra.mxu0 0.0
    %825 = vmatprep.subr.mxu0 0.0
    %826 = vmatpush2.msra.mxu0 0.0
    %827 = vmatprep.subr.mxu0 0.0
    %828 = vmatpush2.msra.mxu0 0.0
    %829 = vmatprep.subr.mxu0 0.0
    %830 = vmatpush2.msra.mxu0 0.0
    %831 = vmatprep.subr.mxu0 0.0
    %832 = vmatpush2.msra.mxu0 0.0
    %833 = vmatprep.subr.mxu0 0.0
    %834 = vmatpush2.msra.mxu0 0.0
    %835 = vmatprep.subr.mxu0 0.0
    %836 = vmatpush2.msra.mxu0 0.0
    %837 = vmatprep.subr.mxu0 0.0
    %838 = vmatpush2.msra.mxu0 0.0
    %839 = vmatprep.subr.mxu0 0.0
    %840 = vmatpush2.msra.mxu0 0.0
    %841 = vmatprep.subr.mxu0 0.0
    %842 = vmatpush2.msra.mxu0 0.0
    %843 = vmatprep.subr.mxu0 0.0
    %844 = vmatpush2.msra.mxu0 0.0
    %845 = vmatprep.subr.mxu0 0.0
    %846 = vmatpush2.msra.mxu0 0.0
    %847 = vmatprep.subr.mxu0 0.0
    %848 = vmatpush2.msra.mxu0 0.0
    %849 = vmatprep.mubr.f32.mxu0 0.0
    %850 = vmatmul.mubr.f32.gmra.mxu0 %v783
    %v851 = vpop.f32.mrf.mxu0
    %v852 = vadd.f32 0.0, %v851
    %v853 = vpop.f32.mrf.mxu0
    %854 = vdwg.mxu0
    %v855 = vadd.f32 %v229, %v852
    %v856 = vtanh.pop %v855
    %v857 = vsel %vm247, %v856, %v781
    %v858 = vld [vmem:[%s6] sm:$0xff]
    %v859 = vld [vmem:[%s6 + $0x8] sm:$0xff]
    %v860 = vld [vmem:[%s6 + $0x10] sm:$0xff]
    %v861 = vld [vmem:[%s6 + $0x18] sm:$0xff]
    %v862 = vld [vmem:[%s7] sm:$0x1]
    %v864 = vlaneseq
    %v865 = vshrl.u32 %v864, 7
    %v866 = vsub.s32 0, %v865
    %v867 = vrot.slane %v862, %v866
    %v870 = vsel %vm249, %v857, 0
    %872 = vmatprep.subr.mxu0 0.0
    %873 = vmatpush1.msra.mxu0 0.0
    %874 = vmatprep.subr.mxu0 0.0
    %875 = vmatpush1.msra.mxu0 0.0
    %876 = vmatprep.subr.mxu0 0.0
    %877 = vmatpush1.msra.mxu0 0.0
    %878 = vmatprep.subr.mxu0 0.0
    %879 = vmatpush1.msra.mxu0 0.0
    %880 = vmatprep.subr.mxu0 0.0
    %881 = vmatpush1.msra.mxu0 0.0
    %882 = vmatprep.subr.mxu0 0.0
    %883 = vmatpush1.msra.mxu0 0.0
    %884 = vmatprep.subr.mxu0 0.0
    %885 = vmatpush1.msra.mxu0 0.0
    %886 = vmatprep.subr.mxu0 0.0
    %887 = vmatpush1.msra.mxu0 0.0
    %888 = vmatprep.subr.mxu0 0.0
    %889 = vmatpush1.msra.mxu0 0.0
    %890 = vmatprep.subr.mxu0 0.0
    %891 = vmatpush1.msra.mxu0 0.0
    %892 = vmatprep.subr.mxu0 0.0
    %893 = vmatpush1.msra.mxu0 0.0
    %894 = vmatprep.subr.mxu0 0.0
    %895 = vmatpush1.msra.mxu0 0.0
    %896 = vmatprep.subr.mxu0 0.0
    %897 = vmatpush1.msra.mxu0 %v861
    %898 = vmatprep.subr.mxu0 0.0
    %899 = vmatpush1.msra.mxu0 %v860
    %900 = vmatprep.subr.mxu0 0.0
    %901 = vmatpush1.msra.mxu0 %v859
    %902 = vmatprep.subr.mxu0 0.0
    %903 = vmatpush1.msra.mxu0 %v858
    %904 = vmatprep.subr.mxu0 0.0
    %905 = vmatpush2.msra.mxu0 0.0
    %906 = vmatprep.subr.mxu0 0.0
    %907 = vmatpush2.msra.mxu0 0.0
    %908 = vmatprep.subr.mxu0 0.0
    %909 = vmatpush2.msra.mxu0 0.0
    %910 = vmatprep.subr.mxu0 0.0
    %911 = vmatpush2.msra.mxu0 0.0
    %912 = vmatprep.subr.mxu0 0.0
    %913 = vmatpush2.msra.mxu0 0.0
    %914 = vmatprep.subr.mxu0 0.0
    %915 = vmatpush2.msra.mxu0 0.0
    %916 = vmatprep.subr.mxu0 0.0
    %917 = vmatpush2.msra.mxu0 0.0
    %918 = vmatprep.subr.mxu0 0.0
    %919 = vmatpush2.msra.mxu0 0.0
    %920 = vmatprep.subr.mxu0 0.0
    %921 = vmatpush2.msra.mxu0 0.0
    %922 = vmatprep.subr.mxu0 0.0
    %923 = vmatpush2.msra.mxu0 0.0
    %924 = vmatprep.subr.mxu0 0.0
    %925 = vmatpush2.msra.mxu0 0.0
    %926 = vmatprep.subr.mxu0 0.0
    %927 = vmatpush2.msra.mxu0 0.0
    %928 = vmatprep.subr.mxu0 0.0
    %929 = vmatpush2.msra.mxu0 0.0
    %930 = vmatprep.subr.mxu0 0.0
    %931 = vmatpush2.msra.mxu0 0.0
    %932 = vmatprep.subr.mxu0 0.0
    %933 = vmatpush2.msra.mxu0 0.0
    %934 = vmatprep.subr.mxu0 0.0
    %935 = vmatpush2.msra.mxu0 0.0
    %936 = vmatprep.mubr.f32.mxu0 0.0
    %937 = vmatmul.mubr.f32.gmra.mxu0 %v870
    %v938 = vpop.f32.mrf.mxu0
    %v939 = vadd.f32 %v867, %v938
    %v940 = vpop.f32.mrf.mxu0
    %941 = vdwg.mxu0
    %942 = vst [vmem:[#allocation2] sm:$0xff] %v939
    // Predicated region
    $region34: #{tpu_custom_call.1} parent=1 // pred_check
      _
    $region35: #{tpu_custom_call.1} parent=1 // pred_check_branch
      %944 = sbr.rel (0) target = $region37
    $region36: #{tpu_custom_call.1} parent=1 // pred_region
      %s946 = ssub.s32 128, 128
      %947 = vsyncadd [#allocation3], %s946
      %s949 = sshll.u32 [#allocation2], 4
      %s950 = int_to_ptr.vmem [resolvable:$true] %s949
      %952 = dma.vmem_to_hbm [thread:$0]  %s950, 128, %s8, [#allocation3]
    $region37: #{tpu_custom_call.1} parent=1 // pred_fallthru
      _
    // Predicated region
    $region38: #{tpu_custom_call.1} parent=1 // pred_check
      _
    $region39: #{tpu_custom_call.1} parent=1 // pred_check_branch
      %954 = sbr.rel (0) target = $region41
    $region40: #{tpu_custom_call.1} parent=1 // pred_region
      %955 = dma.done [#allocation3], 128
    $region41: #{tpu_custom_call.1} parent=1 // pred_fallthru
      _
    %956 = vsyncpa [#allocation3], 1

</llo_original>
